<compile_context>
chip_gen: v7x
topology: tpu7x:2x2x1
jax: 0.10.0
libtpu: 0.0.40
codegen_flags: <defaults>
</compile_context>

<pallas_src>
import functools

import jax
import jax.numpy as jnp
from jax.experimental import pallas as pl
from jax.experimental.pallas import tpu as pltpu


def _round_up(x, m):
    return (x + m - 1) // m * m


def _an_fwd_kernel(x_ref, w1t_ref, w2t_ref, o_ref, acc_ref):
    # x_ref  : (tb, tk)        f32   activation tile
    # w1t_ref: (tk, H)         bf16  fc1 weight (transposed), compact H=64
    # w2t_ref: (H, C_pad)      f32   fc2 weight (transposed), lane-padded 128
    # o_ref  : (1, tb, C_pad)  f32   partial output for this K-split
    # acc_ref: (tb, H)         f32   hidden accumulator (VMEM scratch)
    k = pl.program_id(2)

    @pl.when(k == 0)
    def _():
        acc_ref[...] = jnp.zeros_like(acc_ref)

    xv = x_ref[...]
    wv = w1t_ref[...]
    acc_ref[...] += jnp.dot(xv.astype(wv.dtype), wv,
                            preferred_element_type=jnp.float32)

    @pl.when(k == pl.num_programs(2) - 1)
    def _():
        o_ref[0] = jnp.dot(acc_ref[...], w2t_ref[...],
                           preferred_element_type=jnp.float32
                           ).astype(o_ref.dtype)


def prepare_an_params(w1, b1, w2, b2, *, weight_dtype=jnp.bfloat16):
    """Run ONCE at model-load time.

    Keeps fc1's weight in its compact transposed (D, 64) layout (bf16 by
    default), fc2's weight transposed and lane-padded to (64, 128), and folds
    fc1's bias through fc2:  b_eff = b1 @ W2^T + b2  (added outside the kernel).
    """
    H, D = w1.shape                      # PyTorch layout: (out, in)
    C = w2.shape[0]
    D_pad = _round_up(D, 128)
    C_pad = _round_up(C, 128)

    w1t = (jnp.zeros((D_pad, H), jnp.float32)
           .at[:D, :].set(w1.T).astype(weight_dtype))        # (D_pad, 64)
    w2t = jnp.zeros((H, C_pad), jnp.float32).at[:, :C].set(w2.T)
    b_eff = (jnp.dot(b1, w2.T) + b2).astype(jnp.float32)     # (C,)
    return w1t, w2t, b_eff


@functools.partial(jax.jit, static_argnames=("num_classes",))
def an_forward(x, w1t, w2t, b_eff, *, num_classes):
    """AN.forward: flatten -> fc1 (tiled MXU accumulate) -> fc2 epilogue."""
    B = x.shape[0]
    x_flat = x.reshape(B, -1)                    # nn.Flatten()
    D = x_flat.shape[1]
    D_pad, H = w1t.shape
    H2, C_pad = w2t.shape
    assert H2 == H and D <= D_pad

    # ---- batch tiling ------------------------------------------------------
    if B <= 512:
        tb = _round_up(B, 8)                     # single batch tile
        B_pad = tb
    else:
        tb = 256                                 # fewer weight re-streams
        B_pad = _round_up(B, tb)

    # ---- pad activations: batch always; K only if D is not 128-aligned ----
    pad_b, pad_d = B_pad - B, D_pad - D
    if pad_b or pad_d:
        x_flat = jnp.pad(x_flat, ((0, pad_b), (0, pad_d)))

    # ---- per-generation VMEM budget and contraction-tile selection --------
    try:
        vmem_cap = pltpu.get_tpu_info().vmem_capacity_bytes
    except Exception:  # pragma: no cover - conservative fallback
        vmem_cap = 64 * 1024 * 1024
    pipeline_budget = int(vmem_cap * 0.40)       # for double-buffered streams
    vmem_limit = int(vmem_cap * 0.75)

    x_isz = jnp.dtype(x_flat.dtype).itemsize
    w_isz = jnp.dtype(w1t.dtype).itemsize
    # acc + double-buffered output tile + double-buffered w2t + slack
    fixed = tb * H * 4 + 2 * tb * C_pad * 4 + 2 * H * C_pad * 4 + (1 << 20)
    # double-buffered x tile + w1t tile (count weight lanes as 128: VMEM tiling)
    per_k = 2 * (tb * x_isz + 128 * w_isz)

    n128 = D_pad // 128
    tk_any, tk_even = 128, 0
    for d in range(1, n128 + 1):
        if n128 % d:
            continue
        cand = d * 128                           # divisor of D_pad, 128-aligned
        if cand * per_k + fixed > pipeline_budget:
            continue
        tk_any = max(tk_any, cand)
        if (D_pad // cand) % 2 == 0:
            tk_even = max(tk_even, cand)

    single_batch_tile = (B_pad // tb) == 1
    # Prefer an even number of K steps when the batch axis can't feed both
    # v7x TensorCores, so the reduction itself can be split 2-way.
    tk = tk_even if (single_batch_tile and tk_even) else tk_any
    k_steps = D_pad // tk
    nsplit = 2 if (single_batch_tile and k_steps % 2 == 0) else 1
    kps = k_steps // nsplit

    parts = pl.pallas_call(
        _an_fwd_kernel,
        out_shape=jax.ShapeDtypeStruct((nsplit, B_pad, C_pad), jnp.float32),
        grid=(nsplit, B_pad // tb, kps),
        in_specs=[
            pl.BlockSpec((tb, tk), lambda s, i, k: (i, s * kps + k)),   # x
            pl.BlockSpec((tk, H), lambda s, i, k: (s * kps + k, 0)),    # W1^T
            pl.BlockSpec((H, C_pad), lambda s, i, k: (0, 0)),           # W2^T
        ],
        out_specs=pl.BlockSpec((1, tb, C_pad), lambda s, i, k: (s, i, 0)),
        scratch_shapes=[pltpu.VMEM((tb, H), jnp.float32)],
        compiler_params=pltpu.CompilerParams(
            dimension_semantics=("parallel", "parallel", "arbitrary"),
            vmem_limit_bytes=vmem_limit,
        ),
    )(x_flat, w1t, w2t)

    out = parts[0] if nsplit == 1 else parts.sum(axis=0)
    return out[:B, :num_classes] + b_eff[:num_classes]


if __name__ == "__main__":
    # Small shapes consistent with the module: batch=2, single-channel 16x16
    # image (stand-in for the real 448x448) -> input_size=256, hidden=64,
    # num_classes=2.
    B, Cin, Himg, Wimg = 2, 1, 16, 16
    input_size = Cin * Himg * Wimg
    hidden = 64
    num_classes = 2

    key = jax.random.PRNGKey(0)
    kx, kw1, kb1, kw2, kb2 = jax.random.split(key, 5)

    x = jax.random.normal(kx, (B, Cin, Himg, Wimg), dtype=jnp.float32)
    # PyTorch nn.Linear layout: (out_features, in_features)
    w1 = jax.random.normal(kw1, (hidden, input_size), dtype=jnp.float32) * 0.02
    b1 = jax.random.normal(kb1, (hidden,), dtype=jnp.float32) * 0.02
    w2 = jax.random.normal(kw2, (num_classes, hidden), dtype=jnp.float32) * 0.02
    b2 = jax.random.normal(kb2, (num_classes,), dtype=jnp.float32) * 0.02

    # One-time parameter preparation (compact + bf16 + padded), then forward.
    w1t, w2t, b_eff = prepare_an_params(w1, b1, w2, b2)
    out = an_forward(x, w1t, w2t, b_eff, num_classes=num_classes)
    out = jax.block_until_ready(out)
    assert out.shape == (B, num_classes)

    x_flat = x.reshape(B, -1)
    # Exact f32 PyTorch-semantics reference (loose tolerance documents the
    # bf16 weight/activation quantization with f32 accumulation).
    ref_f32 = (x_flat @ w1.T + b1) @ w2.T + b2
    assert jnp.allclose(out, ref_f32, atol=1e-2, rtol=1e-2)

    # Tight structural check against a reference with the same bf16
    # quantization (catches tiling/indexing bugs independent of precision).
    h_q = jnp.dot(x_flat.astype(jnp.bfloat16), w1.T.astype(jnp.bfloat16),
                  preferred_element_type=jnp.float32)
    ref_q = h_q @ w2.T + (b1 @ w2.T + b2)
    assert jnp.allclose(out, ref_q, atol=1e-3, rtol=1e-3)

    print("KERNEL_OK")
</pallas_src>

<mosaic_0001>
module attributes {stable_mosaic.version = 11 : i64} {
  func.func @_an_fwd_kernel(%arg0: i32, %arg1: i32, %arg2: i32, %arg3: memref<8x128xf32, #tpu.memory_space<vmem>>, %arg4: memref<128x64xbf16, #tpu.memory_space<vmem>>, %arg5: memref<64x128xf32, #tpu.memory_space<vmem>>, %arg6: memref<1x8x128xf32, #tpu.memory_space<vmem>>, %arg7: memref<8x64xf32, #tpu.memory_space<vmem>>) attributes {dimension_semantics = [#tpu.dimension_semantics<parallel>, #tpu.dimension_semantics<parallel>, #tpu.dimension_semantics<arbitrary>], iteration_bounds = array<i64: 2, 1, 1>, scalar_prefetch = 0 : i64, scratch_operands = 1 : i64, tpu.core_type = #tpu.core_type<tc>, window_params = [{transform_indices = @transform_0, window_bounds = array<i64: 8, 128>}, {transform_indices = @transform_1, window_bounds = array<i64: 128, 64>}, {pipeline_mode = #tpu.pipeline_mode<synchronous>, transform_indices = @transform_2, window_bounds = array<i64: 64, 128>}, {transform_indices = @transform_3, window_bounds = array<i64: 1, 8, 128>}]} {
    %c0_i32 = arith.constant 0 : i32
    %0 = arith.cmpi eq, %arg2, %c0_i32 : i32
    %1 = arith.extui %0 : i1 to i32
    %c0_i32_0 = arith.constant 0 : i32
    %2 = arith.cmpi ne, %1, %c0_i32_0 : i32
    scf.if %2 {
      %cst_10 = arith.constant 0.000000e+00 : f32
      %13 = vector.broadcast %cst_10 : f32 to vector<8x64xf32>
      %c0_11 = arith.constant 0 : index
      %c0_12 = arith.constant 0 : index
      %14 = vector.load %arg7[%c0_11, %c0_12] : memref<8x64xf32, #tpu.memory_space<vmem>>, vector<8x64xf32>
      tpu.vector_store %arg7[%c0_11, %c0_12], %13 {strides = array<i32>} : memref<8x64xf32, #tpu.memory_space<vmem>>, vector<8x64xf32>,
    } else {
    }
    %c0 = arith.constant 0 : index
    %c0_1 = arith.constant 0 : index
    %3 = vector.load %arg3[%c0, %c0_1] : memref<8x128xf32, #tpu.memory_space<vmem>>, vector<8x128xf32>
    %c0_2 = arith.constant 0 : index
    %c0_3 = arith.constant 0 : index
    %4 = vector.load %arg4[%c0_2, %c0_3] : memref<128x64xbf16, #tpu.memory_space<vmem>>, vector<128x64xbf16>
    %c0_4 = arith.constant 0 : index
    %c0_5 = arith.constant 0 : index
    %5 = vector.load %arg7[%c0_4, %c0_5] : memref<8x64xf32, #tpu.memory_space<vmem>>, vector<8x64xf32>
    %6 = arith.truncf %3 : vector<8x128xf32> to vector<8x128xbf16>
    %cst = arith.constant dense<0.000000e+00> : vector<8x64xf32>
    %7 = tpu.matmul %6, %4, %cst {dimension_numbers = #tpu.dot_dimension_numbers<[1], [0], [0], [1], [0, 0, 1, 1], [], []>} : vector<8x128xbf16>, vector<128x64xbf16>, vector<8x64xf32> -> vector<8x64xf32>
    %8 = arith.addf %5, %7 : vector<8x64xf32>
    %c0_6 = arith.constant 0 : index
    %c0_7 = arith.constant 0 : index
    %9 = vector.load %arg7[%c0_6, %c0_7] : memref<8x64xf32, #tpu.memory_space<vmem>>, vector<8x64xf32>
    tpu.vector_store %arg7[%c0_6, %c0_7], %8 {strides = array<i32>} : memref<8x64xf32, #tpu.memory_space<vmem>>, vector<8x64xf32>,
    %c0_i32_8 = arith.constant 0 : i32
    %10 = arith.cmpi eq, %arg2, %c0_i32_8 : i32
    %11 = arith.extui %10 : i1 to i32
    %c0_i32_9 = arith.constant 0 : i32
    %12 = arith.cmpi ne, %11, %c0_i32_9 : i32
    scf.if %12 {
      %c0_10 = arith.constant 0 : index
      %c0_11 = arith.constant 0 : index
      %13 = vector.load %arg7[%c0_10, %c0_11] : memref<8x64xf32, #tpu.memory_space<vmem>>, vector<8x64xf32>
      %c0_12 = arith.constant 0 : index
      %c0_13 = arith.constant 0 : index
      %14 = vector.load %arg5[%c0_12, %c0_13] : memref<64x128xf32, #tpu.memory_space<vmem>>, vector<64x128xf32>
      %cst_14 = arith.constant dense<0.000000e+00> : vector<8x128xf32>
      %15 = tpu.matmul %13, %14, %cst_14 {dimension_numbers = #tpu.dot_dimension_numbers<[1], [0], [0], [1], [0, 0, 1, 1], [], []>} : vector<8x64xf32>, vector<64x128xf32>, vector<8x128xf32> -> vector<8x128xf32>
      %c0_15 = arith.constant 0 : index
      %c0_16 = arith.constant 0 : index
      %c0_17 = arith.constant 0 : index
      %16 = vector.load %arg6[%c0_15, %c0_16, %c0_17] : memref<1x8x128xf32, #tpu.memory_space<vmem>>, vector<1x8x128xf32>
      %17 = vector.shape_cast %16 : vector<1x8x128xf32> to vector<8x128xf32>
      %18 = vector.shape_cast %15 : vector<8x128xf32> to vector<1x8x128xf32>
      tpu.vector_store %arg6[%c0_15, %c0_16, %c0_17], %18 {strides = array<i32>} : memref<1x8x128xf32, #tpu.memory_space<vmem>>, vector<1x8x128xf32>,
    } else {
    }
    return
  }
  func.func @transform_0(%arg0: i32, %arg1: i32, %arg2: i32) -> (i32, i32) {
    %c1_i32 = arith.constant 1 : i32
    %0 = arith.muli %arg0, %c1_i32 : i32
    %1 = arith.addi %0, %arg2 : i32
    %c0_i32 = arith.constant 0 : i32
    return %arg1, %1 : i32, i32
  }
  func.func @transform_1(%arg0: i32, %arg1: i32, %arg2: i32) -> (i32, i32) {
    %c1_i32 = arith.constant 1 : i32
    %0 = arith.muli %arg0, %c1_i32 : i32
    %1 = arith.addi %0, %arg2 : i32
    %c0_i32 = arith.constant 0 : i32
    %c0_i32_0 = arith.constant 0 : i32
    return %1, %c0_i32 : i32, i32
  }
  func.func @transform_2(%arg0: i32, %arg1: i32, %arg2: i32) -> (i32, i32) {
    %c0_i32 = arith.constant 0 : i32
    %c0_i32_0 = arith.constant 0 : i32
    %c0_i32_1 = arith.constant 0 : i32
    return %c0_i32, %c0_i32_0 : i32, i32
  }
  func.func @transform_3(%arg0: i32, %arg1: i32, %arg2: i32) -> (i32, i32, i32) {
    %c0_i32 = arith.constant 0 : i32
    %c0_i32_0 = arith.constant 0 : i32
    return %arg0, %arg1, %c0_i32 : i32, i32, i32
  }
}

</mosaic_0001>

<llo_original>
// kernel: an_forward.1
$region0: #{an_forward.1}
  #allocation0 [shape = 'u32[]', space=smem, size = 0x4, offset = 0x4, fixed_abs, tag = 'smem constant byte address 0x4 - core index']
  #allocation1 [shape = 'u32[144,128]{1,0:T(1,128)}', space=vmem, size = 0x12000, scoped, tag = 'internal scratch']
  #allocation2 [shape = 'f32[8,64]{1,0:T(8,128)}', space=vmem, size = 0x1000, scoped, tag = 'scratch operand']
  %s0 = inlined_call_operand.vmem [shape: f32[8,256], index: 0, kind: input, shape index: {}]
  %s1 = inlined_call_operand.vmem [shape: bf16[256,64], index: 1, kind: input, shape index: {}]
  %s2 = inlined_call_operand.vmem [shape: f32[64,128], index: 2, kind: input, shape index: {}]
  %s3 = inlined_call_operand.vmem [shape: f32[2,8,128], index: 3, kind: output, shape index: {}]
  %s4 = sld [smem:[#allocation0]]
  $region53: #{an_forward.1} parent=0
    _
  %s6 = ssub.s32 1, %s4
  %s7 = scalar_select 0, %s6, %s4
  loop: start=0, step=1, limit=4
  $region2: #{an_forward.1} parent=0 // loop_pre_header
    _
  $region3: #{an_forward.1} parent=0 // loop_header
    %s9 = sphi 0, %s13
    %p10 = scmp.ge.s32.totalorder %s9, 4
    %s16 = sphi 0, %s35
    %s17 = sphi 0, %s31
    %s18 = sphi 0, %s27
    %s19 = sphi 0, %s16
    %s20 = sphi 0, %s17
    %s21 = sphi 0, %s18
    %s22 = sphi 0, %s19
    %s23 = sphi 0, %s20
    %s24 = sphi 0, %s21
    %s42 = sphi 0, %s44
    %s45 = sphi 0, %s42
    %s46 = sphi 0, %s45
    %s62 = sphi 0, %s46
    %s70 = sphi 0, %s72
    %s73 = sphi 0, %s70
    %s74 = sphi 0, %s73
    %s90 = sphi 0, %s74
    %s94 = sphi 0, %s94
    %s96 = sphi 0, %s94
    %s97 = sphi 0, %s96
    %s111 = sphi 0, %s97
    %s119 = sphi 0, %s121
    %s122 = sphi 0, %s119
    %s123 = sphi 0, %s122
    %s139 = sphi 0, %s123
  $region4: #{an_forward.1} parent=0 // loop_header_branch
    %12 = sbr.rel (%p10) target = $region8
  $region5: #{an_forward.1} parent=0 // loop_body
    %s14 = ssub.s32 %s9, 1
    %s15 = ssub.s32 %s9, 2
    %s25 = sadd.s32 1, %s18
    %p26 = scmp.ge.s32.totalorder %s25, 1
    %s27 = scalar_select %p26, 0, %s25
    %s28 = sadd.s32 1, %s17
    %s29 = scalar_select %p26, %s28, %s17
    %p30 = scmp.ge.s32.totalorder %s29, 1
    %s31 = scalar_select %p30, 0, %s29
    %s32 = sadd.s32 1, %s16
    %s33 = scalar_select %p30, %s32, %s16
    %p34 = scmp.ge.s32.totalorder %s33, 2
    %s35 = scalar_select %p34, 0, %s33
    %s36 = sadd.s32 %s16, %s18
    %s37 = sadd.s32 %s35, %s27
    %s38 = ssub.s32 %s17, %s31
    %s39 = ssub.s32 %s36, %s37
    %s40 = sor.u32 %s38, %s39
    %p41 = scmp.eq.s32.totalorder %s40, 0
    %s43 = sadd.s32 %s42, 1
    %s44 = scalar_select %p41, %s42, %s43
    %p47 = pneg %p41
    %p48 = scmp.eq.s32.totalorder %s9, 1
    %p49 = por %p47, %p48
    %p50 = scmp.ne.s32.totalorder %s42, %s45
    %p51 = scmp.eq.s32.totalorder %s9, 0
    %p52 = por %p50, %p51
    %p53 = scmp.ne.s32.totalorder %s42, %s45
    %p54 = scmp.eq.s32.totalorder %s14, 1
    %p55 = por %p53, %p54
    %p56 = scmp.ne.s32.totalorder %s45, %s46
    %p57 = scmp.eq.s32.totalorder %s14, 0
    %p58 = por %p56, %p57
    %p59 = scmp.ne.s32.totalorder %s45, %s46
    %p60 = scmp.eq.s32.totalorder %s15, 1
    %p61 = por %p59, %p60
    %p63 = scmp.ne.s32.totalorder %s46, %s62
    %p64 = scmp.eq.s32.totalorder %s15, 0
    %p65 = por %p63, %p64
    %s66 = sadd.s32 %s16, %s18
    %s67 = sadd.s32 %s35, %s27
    %s68 = ssub.s32 %s66, %s67
    %p69 = scmp.eq.s32.totalorder %s68, 0
    %s71 = sadd.s32 %s70, 1
    %s72 = scalar_select %p69, %s70, %s71
    %p75 = pneg %p69
    %p76 = scmp.eq.s32.totalorder %s9, 1
    %p77 = por %p75, %p76
    %p78 = scmp.ne.s32.totalorder %s70, %s73
    %p79 = scmp.eq.s32.totalorder %s9, 0
    %p80 = por %p78, %p79
    %p81 = scmp.ne.s32.totalorder %s70, %s73
    %p82 = scmp.eq.s32.totalorder %s14, 1
    %p83 = por %p81, %p82
    %p84 = scmp.ne.s32.totalorder %s73, %s74
    %p85 = scmp.eq.s32.totalorder %s14, 0
    %p86 = por %p84, %p85
    %p87 = scmp.ne.s32.totalorder %s73, %s74
    %p88 = scmp.eq.s32.totalorder %s15, 1
    %p89 = por %p87, %p88
    %p91 = scmp.ne.s32.totalorder %s74, %s90
    %p92 = scmp.eq.s32.totalorder %s15, 0
    %p93 = por %p91, %p92
    %s95 = sadd.s32 %s94, 1
    %p98 = scmp.eq.s32.totalorder %s9, 1
    %p99 = scmp.ne.s32.totalorder %s94, %s96
    %p100 = scmp.eq.s32.totalorder %s9, 0
    %p101 = por %p99, %p100
    %p102 = scmp.ne.s32.totalorder %s94, %s96
    %p103 = scmp.eq.s32.totalorder %s14, 1
    %p104 = por %p102, %p103
    %p105 = scmp.ne.s32.totalorder %s96, %s97
    %p106 = scmp.eq.s32.totalorder %s14, 0
    %p107 = por %p105, %p106
    %p108 = scmp.ne.s32.totalorder %s96, %s97
    %p109 = scmp.eq.s32.totalorder %s15, 1
    %p110 = por %p108, %p109
    %p112 = scmp.ne.s32.totalorder %s97, %s111
    %p113 = scmp.eq.s32.totalorder %s15, 0
    %p114 = por %p112, %p113
    %s115 = ssub.s32 %s16, %s35
    %s116 = ssub.s32 %s17, %s31
    %s117 = sor.u32 %s115, %s116
    %p118 = scmp.eq.s32.totalorder %s117, 0
    %s120 = sadd.s32 %s119, 1
    %s121 = scalar_select %p118, %s119, %s120
    %p124 = pneg %p118
    %p125 = scmp.eq.s32.totalorder %s9, 1
    %p126 = por %p124, %p125
    %p127 = scmp.ne.s32.totalorder %s119, %s122
    %p128 = scmp.eq.s32.totalorder %s9, 0
    %p129 = por %p127, %p128
    %p130 = scmp.ne.s32.totalorder %s119, %s122
    %p131 = scmp.eq.s32.totalorder %s14, 1
    %p132 = por %p130, %p131
    %p133 = scmp.ne.s32.totalorder %s122, %s123
    %p134 = scmp.eq.s32.totalorder %s14, 0
    %p135 = por %p133, %p134
    %p136 = scmp.ne.s32.totalorder %s122, %s123
    %p137 = scmp.eq.s32.totalorder %s15, 1
    %p138 = por %p136, %p137
    %p140 = scmp.ne.s32.totalorder %s123, %s139
    %p141 = scmp.eq.s32.totalorder %s15, 0
    %p142 = por %p140, %p141
    %p143 = scmp.le.s32.totalorder 1, %s9
    %p144 = scmp.lt.s32.totalorder %s9, 3
    %p145 = pnand %p143, %p144
    %p146 = pneg %p145
    // Predicated region
    $region9: #{an_forward.1} parent=5 // pred_check
      _
    $region10: #{an_forward.1} parent=5 // pred_check_branch
      %148 = sbr.rel (%p145) target = $region12
    $region11: #{an_forward.1} parent=5 // pred_region
      %s149 = ssub.s32 %s9, 1
      // Predicated region
      $region13: #{an_forward.1} parent=11 // pred_check
        %p150 = pneg %p107
      $region14: #{an_forward.1} parent=11 // pred_check_branch
        %152 = sbr.rel (%p150) target = $region16
      $region15: #{an_forward.1} parent=11 // pred_region
        _
      $region16: #{an_forward.1} parent=11 // pred_fallthru
        _
    $region12: #{an_forward.1} parent=5 // pred_fallthru
      _
    %p153 = scmp.lt.s32.totalorder %s9, 2
    // Predicated region
    $region17: #{an_forward.1} parent=5 // pred_check
      %p154 = pneg %p153
    $region18: #{an_forward.1} parent=5 // pred_check_branch
      %156 = sbr.rel (%p154) target = $region20
    $region19: #{an_forward.1} parent=5 // pred_region
      // Predicated region
      $region21: #{an_forward.1} parent=19 // pred_check
        %p157 = pneg %p52
      $region22: #{an_forward.1} parent=19 // pred_check_branch
        %159 = sbr.rel (%p157) target = $region24
      $region23: #{an_forward.1} parent=19 // pred_region
        %s160 = sadd.s32 %s16, %s18
        %p161 = scmp.lt.s32.totalorder %s17, 0
        %s162 = scalar_select %p161, %s17, 0
        %p163 = scmp.lt.s32.totalorder %s160, 1
        %s164 = scalar_select %p163, %s160, 1
        %s165 = smul.addr %s162, 2
        %s166 = sadd.s32 %s164, %s165
        %s167 = smul.addr %s166, 8
        %s168 = scalar_lea.vmem %s0, %s167
        %s169 = sadd.s32 %s16, %s18
      $region24: #{an_forward.1} parent=19 // pred_fallthru
        _
      // Predicated region
      $region25: #{an_forward.1} parent=19 // pred_check
        %p170 = pneg %p80
      $region26: #{an_forward.1} parent=19 // pred_check_branch
        %172 = sbr.rel (%p170) target = $region28
      $region27: #{an_forward.1} parent=19 // pred_region
        %s173 = sadd.s32 %s16, %s18
        %s174 = smul.u32 16, %s173
        %p175 = scmp.lt.s32.totalorder %s174, 31
        %s176 = scalar_select %p175, %s174, 31
        %s177 = smul.addr %s176, 4
        %s178 = scalar_lea.vmem %s1, %s177
        %s179 = sadd.s32 %s16, %s18
        %s180 = smul.u32 16, %s179
      $region28: #{an_forward.1} parent=19 // pred_fallthru
        _
    $region20: #{an_forward.1} parent=5 // pred_fallthru
      _
    %p181 = scmp.le.s32.totalorder 1, %s9
    %p182 = scmp.lt.s32.totalorder %s9, 3
    %p183 = pnand %p181, %p182
    %p184 = pneg %p183
    // Predicated region
    $region29: #{an_forward.1} parent=5 // pred_check
      _
    $region30: #{an_forward.1} parent=5 // pred_check_branch
      %186 = sbr.rel (%p183) target = $region32
    $region31: #{an_forward.1} parent=5 // pred_region
      %s187 = ssub.s32 %s9, 1
      %s188 = sadd.s32 %s19, %s21
      %p189 = scmp.lt.s32.totalorder %s20, 0
      %s190 = scalar_select %p189, %s20, 0
      %p191 = scmp.lt.s32.totalorder %s188, 1
      %s192 = scalar_select %p191, %s188, 1
      %s193 = smul.addr %s190, 2
      %s194 = sadd.s32 %s192, %s193
      %s195 = smul.addr %s194, 8
      %s196 = scalar_lea.vmem %s0, %s195
      %p197 = pneg %p58
      %p198 = pneg %p55
      %s199 = sadd.s32 %s19, %s21
      %s200 = smul.u32 16, %s199
      %p201 = scmp.lt.s32.totalorder %s200, 31
      %s202 = scalar_select %p201, %s200, 31
      %s203 = smul.addr %s202, 4
      %s204 = scalar_lea.vmem %s1, %s203
      %p205 = pneg %p86
      %p206 = pneg %p83
      %p207 = pneg %p107
      %p208 = pneg %p104
      %p209 = pneg %p135
      %p210 = pneg %p132
      %p211 = scmp.lt.s32.totalorder %s19, 1
      %s212 = scalar_select %p211, %s19, 1
      %p213 = scmp.lt.s32.totalorder %s20, 0
      %s214 = scalar_select %p213, %s20, 0
      %s215 = sadd.s32 %s214, %s212
      %s216 = smul.addr %s215, 8
      %s217 = scalar_lea.vmem %s3, %s216
      %s218 = sadd.s32 %s19, %s21
      %p219 = scmp.lt.s32.totalorder %s20, 0
      %s220 = scalar_select %p219, %s20, 0
      %p221 = scmp.lt.s32.totalorder %s218, 1
      %s222 = scalar_select %p221, %s218, 1
      %s223 = smul.addr %s220, 2
      %s224 = sadd.s32 %s222, %s223
      %s225 = smul.addr %s224, 8
      %s226 = scalar_lea.vmem %s0, %s225
      %s227 = sadd.s32 %s19, %s21
      %s228 = sadd.s32 %s19, %s21
      %s229 = smul.u32 16, %s228
      %p230 = scmp.lt.s32.totalorder %s229, 31
      %s231 = scalar_select %p230, %s229, 31
      %s232 = smul.addr %s231, 4
      %s233 = scalar_lea.vmem %s1, %s232
      %s234 = sadd.s32 %s19, %s21
      %s235 = smul.u32 16, %s234
      %p236 = scmp.lt.s32.totalorder %s19, 1
      %s237 = scalar_select %p236, %s19, 1
      %p238 = scmp.lt.s32.totalorder %s20, 0
      %s239 = scalar_select %p238, %s20, 0
      %s240 = sadd.s32 %s239, %s237
      %s241 = smul.addr %s240, 8
      %s242 = scalar_lea.vmem %s3, %s241
      %p244 = scmp.eq.s32.totalorder %s21, 0
      // Predicated region
      $region33: #{an_forward.1} parent=31 // pred_check
        %p245 = pneg %p244
      $region34: #{an_forward.1} parent=31 // pred_check_branch
        %247 = sbr.rel (%p245) target = $region36
      $region35: #{an_forward.1} parent=31 // pred_region
        %vm248 = vcmask 523264
        %249 = vst.msk [vmem:[#allocation2] sm:$0xff] %vm248, 0.0
      $region36: #{an_forward.1} parent=31 // pred_fallthru
        _
      %v250 = vld [vmem:[%s226] sm:$0xff]
      %v251 = vld [vmem:[%s233] sm:$0xf]
      %v252 = vld [vmem:[%s233 + $0x4] sm:$0xf]
      %v253 = vld [vmem:[%s233 + $0x8] sm:$0xf]
      %v254 = vld [vmem:[%s233 + $0xc] sm:$0xf]
      %v255 = vld [vmem:[%s233 + $0x10] sm:$0xf]
      %v256 = vld [vmem:[%s233 + $0x14] sm:$0xf]
      %v257 = vld [vmem:[%s233 + $0x18] sm:$0xf]
      %v258 = vld [vmem:[%s233 + $0x1c] sm:$0xf]
      %v259 = vld [vmem:[%s233 + $0x20] sm:$0xf]
      %v260 = vld [vmem:[%s233 + $0x24] sm:$0xf]
      %v261 = vld [vmem:[%s233 + $0x28] sm:$0xf]
      %v262 = vld [vmem:[%s233 + $0x2c] sm:$0xf]
      %v263 = vld [vmem:[%s233 + $0x30] sm:$0xf]
      %v264 = vld [vmem:[%s233 + $0x34] sm:$0xf]
      %v265 = vld [vmem:[%s233 + $0x38] sm:$0xf]
      %v266 = vld [vmem:[%s233 + $0x3c] sm:$0xf]
      %v267 = vld [vmem:[#allocation2] sm:$0xff]
      %v268 = vpack.c.bf16 %v250, %v250
      %v285 = vunpack.c.l.b16 %v251
      %v286 = vunpack.c.l.b16 %v252
      %v287 = vunpack.c.l.b16 %v253
      %v288 = vunpack.c.l.b16 %v254
      %v289 = vunpack.c.l.b16 %v255
      %v290 = vunpack.c.l.b16 %v256
      %v291 = vunpack.c.l.b16 %v257
      %v292 = vunpack.c.l.b16 %v258
      %v293 = vunpack.c.l.b16 %v259
      %v294 = vunpack.c.l.b16 %v260
      %v295 = vunpack.c.l.b16 %v261
      %v296 = vunpack.c.l.b16 %v262
      %v297 = vunpack.c.l.b16 %v263
      %v298 = vunpack.c.l.b16 %v264
      %v299 = vunpack.c.l.b16 %v265
      %v300 = vunpack.c.l.b16 %v266
      %v301 = vpack.c.b16 %v286, %v285
      %v302 = vpack.c.b16 %v288, %v287
      %v303 = vpack.c.b16 %v290, %v289
      %v304 = vpack.c.b16 %v292, %v291
      %v305 = vpack.c.b16 %v294, %v293
      %v306 = vpack.c.b16 %v296, %v295
      %v307 = vpack.c.b16 %v298, %v297
      %v308 = vpack.c.b16 %v300, %v299
      %317 = vmatprep.subr.bf16.mxu0 0
      %318 = vmatpush1.bf16.msra.mxu0 %v301
      %319 = vmatprep.subr.bf16.mxu0 0
      %320 = vmatpush1.bf16.msra.mxu0 %v302
      %321 = vmatprep.subr.bf16.mxu0 0
      %322 = vmatpush1.bf16.msra.mxu0 %v303
      %323 = vmatprep.subr.bf16.mxu0 0
      %324 = vmatpush1.bf16.msra.mxu0 %v304
      %325 = vmatprep.subr.bf16.mxu0 0
      %326 = vmatpush1.bf16.msra.mxu0 %v305
      %327 = vmatprep.subr.bf16.mxu0 0
      %328 = vmatpush1.bf16.msra.mxu0 %v306
      %329 = vmatprep.subr.bf16.mxu0 0
      %330 = vmatpush1.bf16.msra.mxu0 %v307
      %331 = vmatprep.subr.bf16.mxu0 0
      %332 = vmatpush1.bf16.msra.mxu0 %v308
      %333 = vmatprep.subr.bf16.mxu0 0
      %334 = vmatpush1.bf16.msra.mxu0 0
      %335 = vmatprep.subr.bf16.mxu0 0
      %336 = vmatpush1.bf16.msra.mxu0 0
      %337 = vmatprep.subr.bf16.mxu0 0
      %338 = vmatpush1.bf16.msra.mxu0 0
      %339 = vmatprep.subr.bf16.mxu0 0
      %340 = vmatpush1.bf16.msra.mxu0 0
      %341 = vmatprep.subr.bf16.mxu0 0
      %342 = vmatpush1.bf16.msra.mxu0 0
      %343 = vmatprep.subr.bf16.mxu0 0
      %344 = vmatpush1.bf16.msra.mxu0 0
      %345 = vmatprep.subr.bf16.mxu0 0
      %346 = vmatpush1.bf16.msra.mxu0 0
      %347 = vmatprep.subr.bf16.mxu0 0
      %348 = vmatpush1.bf16.msra.mxu0 0
      %349 = vmatprep.mubr.bf16.mxu0 0
      %350 = vmatmul.mubr.bf16.gmra.mrb[0].mxu0 %v268
      %v351 = vpop.f32.mrb[0].mxu0
      %v352 = vadd.f32 0.0, %v351
      %v353 = vpop.f32.mrb[0].mxu0
      %v354 = vpop.f32.mrb[0].mxu0
      %v355 = vpop.f32.mrb[0].mxu0
      %356 = vdwg.mxu0
      %v357 = vadd.f32 %v267, %v352
      %vm358 = vcmask 523264
      %359 = vst.msk [vmem:[#allocation2] sm:$0xff] %vm358, %v357
      // Predicated region
      $region37: #{an_forward.1} parent=31 // pred_check
        %p360 = pneg %p244
      $region38: #{an_forward.1} parent=31 // pred_check_branch
        %362 = sbr.rel (%p360) target = $region40
      $region39: #{an_forward.1} parent=31 // pred_region
        %v363 = vld [vmem:[#allocation2] sm:$0xff]
        %v364 = vld [vmem:[%s2] sm:$0xff]
        %v365 = vld [vmem:[%s2 + $0x8] sm:$0xff]
        %v366 = vld [vmem:[%s2 + $0x10] sm:$0xff]
        %v367 = vld [vmem:[%s2 + $0x18] sm:$0xff]
        %v368 = vld [vmem:[%s2 + $0x20] sm:$0xff]
        %v369 = vld [vmem:[%s2 + $0x28] sm:$0xff]
        %v370 = vld [vmem:[%s2 + $0x30] sm:$0xff]
        %v371 = vld [vmem:[%s2 + $0x38] sm:$0xff]
        %v373 = vsel %vm358, %v363, 0
        %375 = vmatprep.subr.mxu0 0.0
        %376 = vmatpush1.msra.mxu0 %v364
        %377 = vmatprep.subr.mxu0 0.0
        %378 = vmatpush1.msra.mxu0 %v365
        %379 = vmatprep.subr.mxu0 0.0
        %380 = vmatpush1.msra.mxu0 %v366
        %381 = vmatprep.subr.mxu0 0.0
        %382 = vmatpush1.msra.mxu0 %v367
        %383 = vmatprep.subr.mxu0 0.0
        %384 = vmatpush1.msra.mxu0 %v368
        %385 = vmatprep.subr.mxu0 0.0
        %386 = vmatpush1.msra.mxu0 %v369
        %387 = vmatprep.subr.mxu0 0.0
        %388 = vmatpush1.msra.mxu0 %v370
        %389 = vmatprep.subr.mxu0 0.0
        %390 = vmatpush1.msra.mxu0 %v371
        %391 = vmatprep.subr.mxu0 0.0
        %392 = vmatpush1.msra.mxu0 0.0
        %393 = vmatprep.subr.mxu0 0.0
        %394 = vmatpush1.msra.mxu0 0.0
        %395 = vmatprep.subr.mxu0 0.0
        %396 = vmatpush1.msra.mxu0 0.0
        %397 = vmatprep.subr.mxu0 0.0
        %398 = vmatpush1.msra.mxu0 0.0
        %399 = vmatprep.subr.mxu0 0.0
        %400 = vmatpush1.msra.mxu0 0.0
        %401 = vmatprep.subr.mxu0 0.0
        %402 = vmatpush1.msra.mxu0 0.0
        %403 = vmatprep.subr.mxu0 0.0
        %404 = vmatpush1.msra.mxu0 0.0
        %405 = vmatprep.subr.mxu0 0.0
        %406 = vmatpush1.msra.mxu0 0.0
        %407 = vmatprep.subr.mxu0 0.0
        %408 = vmatpush1.msra.mxu0 0.0
        %409 = vmatprep.subr.mxu0 0.0
        %410 = vmatpush1.msra.mxu0 0.0
        %411 = vmatprep.subr.mxu0 0.0
        %412 = vmatpush1.msra.mxu0 0.0
        %413 = vmatprep.subr.mxu0 0.0
        %414 = vmatpush1.msra.mxu0 0.0
        %415 = vmatprep.subr.mxu0 0.0
        %416 = vmatpush1.msra.mxu0 0.0
        %417 = vmatprep.subr.mxu0 0.0
        %418 = vmatpush1.msra.mxu0 0.0
        %419 = vmatprep.subr.mxu0 0.0
        %420 = vmatpush1.msra.mxu0 0.0
        %421 = vmatprep.subr.mxu0 0.0
        %422 = vmatpush1.msra.mxu0 0.0
        %423 = vmatprep.subr.mxu0 0.0
        %424 = vmatpush1.msra.mxu0 0.0
        %425 = vmatprep.subr.mxu0 0.0
        %426 = vmatpush1.msra.mxu0 0.0
        %427 = vmatprep.subr.mxu0 0.0
        %428 = vmatpush1.msra.mxu0 0.0
        %429 = vmatprep.subr.mxu0 0.0
        %430 = vmatpush1.msra.mxu0 0.0
        %431 = vmatprep.subr.mxu0 0.0
        %432 = vmatpush1.msra.mxu0 0.0
        %433 = vmatprep.subr.mxu0 0.0
        %434 = vmatpush1.msra.mxu0 0.0
        %435 = vmatprep.subr.mxu0 0.0
        %436 = vmatpush1.msra.mxu0 0.0
        %437 = vmatprep.subr.mxu0 0.0
        %438 = vmatpush1.msra.mxu0 0.0
        %439 = vmatprep.mubr.f32.mxu0 0.0
        %440 = vmatmul.mubr.f32.gmra.mrb[0].mxu0 %v373
        %v441 = vpop.f32.mrb[0].mxu0
        %v442 = vadd.f32 0.0, %v441
        %v443 = vpop.f32.mrb[0].mxu0
        %444 = vdwg.mxu0
        %445 = vst [vmem:[%s242] sm:$0xff] %v442
      $region40: #{an_forward.1} parent=31 // pred_fallthru
        _
      %p446 = scmp.lt.s32.totalorder %s19, 1
      %s447 = scalar_select %p446, %s19, 1
      %p448 = scmp.lt.s32.totalorder %s20, 0
      %s449 = scalar_select %p448, %s20, 0
      %s450 = sadd.s32 %s449, %s447
      %s451 = smul.addr %s450, 8
      %s452 = scalar_lea.vmem %s3, %s451
      // Predicated region
      $region41: #{an_forward.1} parent=31 // pred_check
        %p453 = pneg %p132
      $region42: #{an_forward.1} parent=31 // pred_check_branch
        %455 = sbr.rel (%p453) target = $region44
      $region43: #{an_forward.1} parent=31 // pred_region
        _
      $region44: #{an_forward.1} parent=31 // pred_fallthru
        _
    $region32: #{an_forward.1} parent=5 // pred_fallthru
      _
    %p456 = scmp.le.s32.totalorder 2, %s9
    // Predicated region
    $region45: #{an_forward.1} parent=5 // pred_check
      %p457 = pneg %p456
    $region46: #{an_forward.1} parent=5 // pred_check_branch
      %459 = sbr.rel (%p457) target = $region48
    $region47: #{an_forward.1} parent=5 // pred_region
      %s460 = ssub.s32 %s9, 2
      // Predicated region
      $region49: #{an_forward.1} parent=47 // pred_check
        %p461 = pneg %p138
      $region50: #{an_forward.1} parent=47 // pred_check_branch
        %463 = sbr.rel (%p461) target = $region52
      $region51: #{an_forward.1} parent=47 // pred_region
        %p464 = scmp.lt.s32.totalorder %s22, 1
        %s465 = scalar_select %p464, %s22, 1
        %p466 = scmp.lt.s32.totalorder %s23, 0
        %s467 = scalar_select %p466, %s23, 0
        %s468 = sadd.s32 %s467, %s465
        %s469 = smul.addr %s468, 8
        %s470 = scalar_lea.vmem %s3, %s469
      $region52: #{an_forward.1} parent=47 // pred_fallthru
        _
    $region48: #{an_forward.1} parent=5 // pred_fallthru
      _
  $region6: #{an_forward.1} parent=0 // loop_footer
    %s13 = sadd.s32 1, %s9
  $region7: #{an_forward.1} parent=0 // loop_footer_branch
    %8 = sbr.rel target = $region3
  $region8: #{an_forward.1} parent=0 // loop_exit
    _

</llo_original>
